<compile_context>
chip_gen: v7x
topology: tpu7x:2x2x1
jax: 0.10.0
libtpu: 0.0.40
codegen_flags: <defaults>
</compile_context>

<pallas_src>
import functools

import jax
import jax.numpy as jnp
from jax.experimental import pallas as pl
from jax.experimental.pallas import tpu as pltpu

LANE = 128


def _round_up(x, m):
    return (x + m - 1) // m * m


def _cdiv(a, b):
    return -(-a // b)


def _vmem_capacity_bytes():
    try:
        return int(pltpu.get_tpu_info().vmem_capacity_bytes)
    except Exception:
        return 64 << 20  # conservative fallback: v7x physical VMEM per TC


# ---------------------------------------------------------------------------
# Kernel
# ---------------------------------------------------------------------------
def _edge_mlp_kernel(num_layers, x_ref, *refs):
    """refs = (w0, b0, [w1, b1, ..., w_{L-1}, b_{L-1}], out_ref).

    x_ref : (edge_tile, Fin) bf16 tile of cat([senders, edges, receivers]).
    w_i   : VMEM-resident bf16 weights, already transposed / zero-padded.
    b_i   : VMEM-resident f32 biases, shape (1, out_width_i).
    """
    out_ref = refs[-1]
    params = refs[:-1]

    # Layer 0: one MXU matmul over the fused concat input, f32 accumulation.
    w0, b0 = params[0], params[1]
    h = jnp.dot(x_ref[...], w0[...], preferred_element_type=jnp.float32)
    h = jnp.maximum(h + b0[...], 0.0)                 # bias + ReLU in f32

    idx = 2
    for _ in range(1, num_layers):
        w, b = params[idx], params[idx + 1]
        idx += 2
        h = jnp.dot(h.astype(w.dtype), w[...],
                    preferred_element_type=jnp.float32) + b[...]
        h = jnp.maximum(h, 0.0)                       # ReLU

    out_ref[...] = h.astype(out_ref.dtype)


# ---------------------------------------------------------------------------
# Wrapper
# ---------------------------------------------------------------------------
def edge_model_forward(nodes, edges, edge_indices, params, *,
                       edge_tile=None, use_bf16=True):
    """Pallas implementation of EdgeModel.forward.

    params: list of (W, b) with W of shape (out_feat, in_feat) (PyTorch Linear
    convention) and b of shape (out_feat,).
    """
    in_node_features = nodes.shape[1]
    in_edge_features = edges.shape[1]
    num_edges = edges.shape[0]
    num_layers = len(params)
    fc_features = params[0][0].shape[0]
    in_features = 2 * in_node_features + in_edge_features

    # Hidden layers are zero-padded to a lane-dense width (full MXU N,
    # unmasked intermediate stores); the FINAL layer stays at fc_features so
    # the kernel only writes the bytes the caller actually needs.
    fc_pad = _round_up(fc_features, LANE)

    compute_dtype = jnp.bfloat16 if use_bf16 else jnp.float32
    act_bytes = 2 if use_bf16 else 4

    # --- glue: gather sender/receiver features and fuse the concat in the
    # wrapper (the gather materializes them anyway, so the concat is free for
    # XLA).  One (E, Fin) input stream instead of three.
    # TODO(synk): in-kernel gather from a VMEM-resident node table.
    senders = nodes[edge_indices[0]]                   # (E, Fn)
    receivers = nodes[edge_indices[1]]                 # (E, Fn)
    x = jnp.concatenate([senders, edges, receivers], axis=1).astype(compute_dtype)

    # --- edge-axis tiling.
    vmem_cap = _vmem_capacity_bytes()
    if edge_tile is None:
        # Bigger tiles on the 128 MiB-VMEM generations (v5e/v6e, single TC);
        # v7x has 64 MiB and two TCs, so favour >=2 grid steps instead.
        edge_tile = 4096 if vmem_cap >= (100 << 20) else 2048
    # Multiple of 16 (bf16 sublane packing); at most half the edge count so
    # the "parallel" grid axis gets >=2 steps to shard across TensorCores.
    max_tile = _round_up(max(_cdiv(num_edges, 2), 16), 16)
    edge_tile = max(16, min(_round_up(int(edge_tile), 16), max_tile))
    num_edges_pad = _round_up(num_edges, edge_tile)
    if num_edges_pad != num_edges:
        # NB: padded rows come out as ReLU(bias) != 0; they are sliced off below.
        x = jnp.pad(x, ((0, num_edges_pad - num_edges), (0, 0)))

    # --- parameters: transpose to (in, out), zero-pad hidden widths, cast bf16.
    def out_width(i):
        return fc_features if i == num_layers - 1 else fc_pad

    w0, b0 = params[0]
    ow0 = out_width(0)
    w0t = jnp.pad(w0.T, ((0, 0), (0, ow0 - fc_features)))       # (Fin, ow0)
    flat_params = [
        w0t.astype(compute_dtype),
        jnp.pad(b0, (0, ow0 - fc_features)).reshape(1, ow0).astype(jnp.float32),
    ]
    for i in range(1, num_layers):
        w, b = params[i]
        ow = out_width(i)
        wt = jnp.pad(w.T, ((0, fc_pad - fc_features), (0, ow - fc_features)))
        flat_params.append(wt.astype(compute_dtype))
        flat_params.append(
            jnp.pad(b, (0, ow - fc_features)).reshape(1, ow).astype(jnp.float32))

    out_w = out_width(num_layers - 1)                  # == fc_features
    grid = (num_edges_pad // edge_tile,)
    edge_tiled = lambda i: (i, 0)                      # tiles move along edges

    in_specs = [pl.BlockSpec((edge_tile, in_features), edge_tiled)]
    # Weights / biases: full-array VMEM residents (no per-step double-buffer).
    for _ in flat_params:
        in_specs.append(pl.BlockSpec(memory_space=pltpu.MemorySpace.VMEM))
    out_spec = pl.BlockSpec((edge_tile, out_w), edge_tiled)

    # --- VMEM budget: double-buffered input/output tiles + intermediates +
    # resident params, capped at ~85% of this generation's physical VMEM.
    in_tile_bytes = edge_tile * in_features * act_bytes
    out_tile_bytes = edge_tile * out_w * 4
    interm_bytes = edge_tile * fc_pad * 4 * max(2, num_layers)
    param_bytes = sum(int(p.size) * p.dtype.itemsize for p in flat_params)
    est = 2 * (in_tile_bytes + out_tile_bytes) + interm_bytes + param_bytes + (4 << 20)
    vmem_limit = int(min(max(est, 32 << 20), max(32 << 20, int(vmem_cap * 0.85))))

    # --- advisory cost estimate for XLA's scheduler around the custom call.
    flops = 2 * num_edges_pad * (
        in_features * ow0 + sum(fc_pad * out_width(i) for i in range(1, num_layers)))
    bytes_accessed = (num_edges_pad * in_features * act_bytes
                      + param_bytes
                      + num_edges_pad * out_w * 4)
    cost = pl.CostEstimate(flops=int(flops), transcendentals=0,
                           bytes_accessed=int(bytes_accessed))

    kernel = functools.partial(_edge_mlp_kernel, num_layers)

    out = pl.pallas_call(
        kernel,
        out_shape=jax.ShapeDtypeStruct((num_edges_pad, out_w), jnp.float32),
        grid=grid,
        in_specs=in_specs,
        out_specs=out_spec,
        compiler_params=pltpu.CompilerParams(
            dimension_semantics=("parallel",),
            vmem_limit_bytes=vmem_limit,
        ),
        cost_estimate=cost,
    )(x, *flat_params)

    if num_edges_pad != num_edges:
        out = out[:num_edges]                          # drop padded edge rows
    return out


# ---------------------------------------------------------------------------
# Deterministic parameter init (mimics PyTorch nn.Linear default: U(-k, k),
# k = 1/sqrt(fan_in)) and a pure-JAX f32 reference for sanity checking.
# ---------------------------------------------------------------------------
def init_edge_model_params(key, in_node_features, in_edge_features,
                           fc_features, fc_layers):
    in_features = in_node_features + in_edge_features + in_node_features
    params = []
    for _ in range(fc_layers):
        key, kw, kb = jax.random.split(key, 3)
        bound = 1.0 / jnp.sqrt(in_features)
        w = jax.random.uniform(kw, (fc_features, in_features),
                               minval=-bound, maxval=bound, dtype=jnp.float32)
        b = jax.random.uniform(kb, (fc_features,),
                               minval=-bound, maxval=bound, dtype=jnp.float32)
        params.append((w, b))
        in_features = fc_features
    return params


def edge_model_reference(nodes, edges, edge_indices, params):
    senders = nodes[edge_indices[0]]
    receivers = nodes[edge_indices[1]]
    out = jnp.concatenate([senders, edges, receivers], axis=1)
    for (w, b) in params:
        out = jnp.maximum(out @ w.T + b, 0.0)
    return out


# ---------------------------------------------------------------------------
if __name__ == "__main__":
    # Small shapes consistent with the module (enough edges for >=2 edge tiles
    # so the "parallel" grid axis exercises both v7x TensorCores).
    num_nodes = 64
    num_edges = 512
    in_node_features = 16
    in_edge_features = 8
    fc_features = 32
    fc_layers = 2

    key = jax.random.PRNGKey(0)
    k_nodes, k_edges, k_idx, k_params = jax.random.split(key, 4)

    nodes = jax.random.normal(k_nodes, (num_nodes, in_node_features), dtype=jnp.float32)
    edges = jax.random.normal(k_edges, (num_edges, in_edge_features), dtype=jnp.float32)
    edge_indices = jax.random.randint(
        k_idx, (2, num_edges), minval=0, maxval=num_nodes, dtype=jnp.int32)

    params = init_edge_model_params(
        k_params, in_node_features, in_edge_features, fc_features, fc_layers)

    out = edge_model_forward(nodes, edges, edge_indices, params)
    out = jax.block_until_ready(out)

    ref = edge_model_reference(nodes, edges, edge_indices, params)
    assert out.shape == (num_edges, fc_features), out.shape
    max_err = float(jnp.max(jnp.abs(out - ref)))
    # bf16 MXU operands with f32 accumulation -> small deviation vs f32 reference.
    assert jnp.allclose(out, ref, atol=5e-2, rtol=5e-2), (
        f"mismatch vs reference (max abs err {max_err})")

    print("KERNEL_OK")
</pallas_src>

<mosaic_0001>
module attributes {stable_mosaic.version = 11 : i64} {
  func.func @_edge_mlp_kernel(%arg0: i32, %arg1: memref<256x40xbf16, #tpu.memory_space<vmem>>, %arg2: memref<40x128xbf16, #tpu.memory_space<vmem>>, %arg3: memref<1x128xf32, #tpu.memory_space<vmem>>, %arg4: memref<128x32xbf16, #tpu.memory_space<vmem>>, %arg5: memref<1x32xf32, #tpu.memory_space<vmem>>, %arg6: memref<256x32xf32, #tpu.memory_space<vmem>>) attributes {dimension_semantics = [#tpu.dimension_semantics<parallel>], iteration_bounds = array<i64: 2>, scalar_prefetch = 0 : i64, scratch_operands = 0 : i64, tpu.core_type = #tpu.core_type<tc>, window_params = [{transform_indices = @transform_0, window_bounds = array<i64: 256, 40>}, {pipeline_mode = #tpu.pipeline_mode<synchronous>, transform_indices = @transform_1, window_bounds = array<i64: 40, 128>}, {pipeline_mode = #tpu.pipeline_mode<synchronous>, transform_indices = @transform_2, window_bounds = array<i64: 1, 128>}, {pipeline_mode = #tpu.pipeline_mode<synchronous>, transform_indices = @transform_3, window_bounds = array<i64: 128, 32>}, {pipeline_mode = #tpu.pipeline_mode<synchronous>, transform_indices = @transform_4, window_bounds = array<i64: 1, 32>}, {transform_indices = @transform_5, window_bounds = array<i64: 256, 32>}]} {
    %c0 = arith.constant 0 : index
    %c0_0 = arith.constant 0 : index
    %0 = vector.load %arg1[%c0, %c0_0] : memref<256x40xbf16, #tpu.memory_space<vmem>>, vector<256x40xbf16>
    %c0_1 = arith.constant 0 : index
    %c0_2 = arith.constant 0 : index
    %1 = vector.load %arg2[%c0_1, %c0_2] : memref<40x128xbf16, #tpu.memory_space<vmem>>, vector<40x128xbf16>
    %cst = arith.constant dense<0.000000e+00> : vector<256x128xf32>
    %2 = tpu.matmul %0, %1, %cst {dimension_numbers = #tpu.dot_dimension_numbers<[1], [0], [0], [1], [0, 0, 1, 1], [], []>} : vector<256x40xbf16>, vector<40x128xbf16>, vector<256x128xf32> -> vector<256x128xf32>
    %c0_3 = arith.constant 0 : index
    %c0_4 = arith.constant 0 : index
    %3 = vector.load %arg3[%c0_3, %c0_4] : memref<1x128xf32, #tpu.memory_space<vmem>>, vector<1x128xf32>
    %4 = vector.broadcast %3 : vector<1x128xf32> to vector<256x128xf32>
    %5 = arith.addf %2, %4 : vector<256x128xf32>
    %cst_5 = arith.constant 0.000000e+00 : f32
    %6 = vector.broadcast %cst_5 : f32 to vector<256x128xf32>
    %7 = arith.maximumf %5, %6 : vector<256x128xf32>
    %8 = arith.truncf %7 : vector<256x128xf32> to vector<256x128xbf16>
    %c0_6 = arith.constant 0 : index
    %c0_7 = arith.constant 0 : index
    %9 = vector.load %arg4[%c0_6, %c0_7] : memref<128x32xbf16, #tpu.memory_space<vmem>>, vector<128x32xbf16>
    %cst_8 = arith.constant dense<0.000000e+00> : vector<256x32xf32>
    %10 = tpu.matmul %8, %9, %cst_8 {dimension_numbers = #tpu.dot_dimension_numbers<[1], [0], [0], [1], [0, 0, 1, 1], [], []>} : vector<256x128xbf16>, vector<128x32xbf16>, vector<256x32xf32> -> vector<256x32xf32>
    %c0_9 = arith.constant 0 : index
    %c0_10 = arith.constant 0 : index
    %11 = vector.load %arg5[%c0_9, %c0_10] : memref<1x32xf32, #tpu.memory_space<vmem>>, vector<1x32xf32>
    %12 = vector.broadcast %11 : vector<1x32xf32> to vector<256x32xf32>
    %13 = arith.addf %10, %12 : vector<256x32xf32>
    %cst_11 = arith.constant 0.000000e+00 : f32
    %14 = vector.broadcast %cst_11 : f32 to vector<256x32xf32>
    %15 = arith.maximumf %13, %14 : vector<256x32xf32>
    %c0_12 = arith.constant 0 : index
    %c0_13 = arith.constant 0 : index
    %16 = vector.load %arg6[%c0_12, %c0_13] : memref<256x32xf32, #tpu.memory_space<vmem>>, vector<256x32xf32>
    tpu.vector_store %arg6[%c0_12, %c0_13], %15 {strides = array<i32>} : memref<256x32xf32, #tpu.memory_space<vmem>>, vector<256x32xf32>,
    return
  }
  func.func @transform_0(%arg0: i32) -> (i32, i32) {
    %c0_i32 = arith.constant 0 : i32
    %c0_i32_0 = arith.constant 0 : i32
    return %arg0, %c0_i32 : i32, i32
  }
  func.func @transform_1(%arg0: i32) -> (i32, i32) {
    %c0_i32 = arith.constant 0 : i32
    %c0_i32_0 = arith.constant 0 : i32
    %c0_i32_1 = arith.constant 0 : i32
    return %c0_i32, %c0_i32_0 : i32, i32
  }
  func.func @transform_2(%arg0: i32) -> (i32, i32) {
    %c0_i32 = arith.constant 0 : i32
    %c0_i32_0 = arith.constant 0 : i32
    %c0_i32_1 = arith.constant 0 : i32
    return %c0_i32, %c0_i32_0 : i32, i32
  }
  func.func @transform_3(%arg0: i32) -> (i32, i32) {
    %c0_i32 = arith.constant 0 : i32
    %c0_i32_0 = arith.constant 0 : i32
    %c0_i32_1 = arith.constant 0 : i32
    return %c0_i32, %c0_i32_0 : i32, i32
  }
  func.func @transform_4(%arg0: i32) -> (i32, i32) {
    %c0_i32 = arith.constant 0 : i32
    %c0_i32_0 = arith.constant 0 : i32
    %c0_i32_1 = arith.constant 0 : i32
    return %c0_i32, %c0_i32_0 : i32, i32
  }
  func.func @transform_5(%arg0: i32) -> (i32, i32) {
    %c0_i32 = arith.constant 0 : i32
    %c0_i32_0 = arith.constant 0 : i32
    return %arg0, %c0_i32 : i32, i32
  }
}

</mosaic_0001>

<llo_original>
// kernel: tpu_custom_call.1
$region0: #{tpu_custom_call.1}
  #allocation0 [shape = 'u32[]', space=smem, size = 0x4, offset = 0x4, fixed_abs, tag = 'smem constant byte address 0x4 - core index']
  #allocation1 [shape = 'u32[144,128]{1,0:T(1,128)}', space=vmem, size = 0x12000, scoped, tag = 'internal scratch']
  %s0 = inlined_call_operand.vmem [shape: bf16[512,40], index: 0, kind: input, shape index: {}]
  %s1 = inlined_call_operand.vmem [shape: bf16[40,128], index: 1, kind: input, shape index: {}]
  %s2 = inlined_call_operand.vmem [shape: f32[1,128], index: 2, kind: input, shape index: {}]
  %s3 = inlined_call_operand.vmem [shape: bf16[128,32], index: 3, kind: input, shape index: {}]
  %s4 = inlined_call_operand.vmem [shape: f32[1,32], index: 4, kind: input, shape index: {}]
  %s5 = inlined_call_operand.vmem [shape: f32[512,32], index: 5, kind: output, shape index: {}]
  %s6 = sld [smem:[#allocation0]]
  $region53: #{tpu_custom_call.1} parent=0
    _
  %s8 = ssub.s32 1, %s6
  %s9 = scalar_select 0, %s8, %s6
  loop: start=0, step=1, limit=4
  $region2: #{tpu_custom_call.1} parent=0 // loop_pre_header
    _
  $region3: #{tpu_custom_call.1} parent=0 // loop_header
    %s11 = sphi 0, %s15
    %p12 = scmp.ge.s32.totalorder %s11, 4
    %s21 = sphi 0, %s23
    %s24 = sphi 0, %s21
    %s25 = sphi 0, %s24
    %s41 = sphi 0, %s25
    %s45 = sphi 0, %s45
    %s47 = sphi 0, %s45
    %s48 = sphi 0, %s47
    %s62 = sphi 0, %s48
    %s66 = sphi 0, %s66
    %s68 = sphi 0, %s66
    %s69 = sphi 0, %s68
    %s83 = sphi 0, %s69
    %s87 = sphi 0, %s87
    %s89 = sphi 0, %s87
    %s90 = sphi 0, %s89
    %s104 = sphi 0, %s90
    %s108 = sphi 0, %s108
    %s110 = sphi 0, %s108
    %s111 = sphi 0, %s110
    %s125 = sphi 0, %s111
    %s131 = sphi 0, %s133
    %s134 = sphi 0, %s131
    %s135 = sphi 0, %s134
    %s151 = sphi 0, %s135
  $region4: #{tpu_custom_call.1} parent=0 // loop_header_branch
    %14 = sbr.rel (%p12) target = $region8
  $region5: #{tpu_custom_call.1} parent=0 // loop_body
    %s16 = ssub.s32 %s11, 1
    %s17 = ssub.s32 %s11, 2
    %s18 = sadd.s32 %s11, 1
    %s19 = ssub.s32 %s11, %s18
    %p20 = scmp.eq.s32.totalorder %s19, 0
    %s22 = sadd.s32 %s21, 1
    %s23 = scalar_select %p20, %s21, %s22
    %p26 = pneg %p20
    %p27 = scmp.eq.s32.totalorder %s11, 1
    %p28 = por %p26, %p27
    %p29 = scmp.ne.s32.totalorder %s21, %s24
    %p30 = scmp.eq.s32.totalorder %s11, 0
    %p31 = por %p29, %p30
    %p32 = scmp.ne.s32.totalorder %s21, %s24
    %p33 = scmp.eq.s32.totalorder %s16, 1
    %p34 = por %p32, %p33
    %p35 = scmp.ne.s32.totalorder %s24, %s25
    %p36 = scmp.eq.s32.totalorder %s16, 0
    %p37 = por %p35, %p36
    %p38 = scmp.ne.s32.totalorder %s24, %s25
    %p39 = scmp.eq.s32.totalorder %s17, 1
    %p40 = por %p38, %p39
    %p42 = scmp.ne.s32.totalorder %s25, %s41
    %p43 = scmp.eq.s32.totalorder %s17, 0
    %p44 = por %p42, %p43
    %s46 = sadd.s32 %s45, 1
    %p49 = scmp.eq.s32.totalorder %s11, 1
    %p50 = scmp.ne.s32.totalorder %s45, %s47
    %p51 = scmp.eq.s32.totalorder %s11, 0
    %p52 = por %p50, %p51
    %p53 = scmp.ne.s32.totalorder %s45, %s47
    %p54 = scmp.eq.s32.totalorder %s16, 1
    %p55 = por %p53, %p54
    %p56 = scmp.ne.s32.totalorder %s47, %s48
    %p57 = scmp.eq.s32.totalorder %s16, 0
    %p58 = por %p56, %p57
    %p59 = scmp.ne.s32.totalorder %s47, %s48
    %p60 = scmp.eq.s32.totalorder %s17, 1
    %p61 = por %p59, %p60
    %p63 = scmp.ne.s32.totalorder %s48, %s62
    %p64 = scmp.eq.s32.totalorder %s17, 0
    %p65 = por %p63, %p64
    %s67 = sadd.s32 %s66, 1
    %p70 = scmp.eq.s32.totalorder %s11, 1
    %p71 = scmp.ne.s32.totalorder %s66, %s68
    %p72 = scmp.eq.s32.totalorder %s11, 0
    %p73 = por %p71, %p72
    %p74 = scmp.ne.s32.totalorder %s66, %s68
    %p75 = scmp.eq.s32.totalorder %s16, 1
    %p76 = por %p74, %p75
    %p77 = scmp.ne.s32.totalorder %s68, %s69
    %p78 = scmp.eq.s32.totalorder %s16, 0
    %p79 = por %p77, %p78
    %p80 = scmp.ne.s32.totalorder %s68, %s69
    %p81 = scmp.eq.s32.totalorder %s17, 1
    %p82 = por %p80, %p81
    %p84 = scmp.ne.s32.totalorder %s69, %s83
    %p85 = scmp.eq.s32.totalorder %s17, 0
    %p86 = por %p84, %p85
    %s88 = sadd.s32 %s87, 1
    %p91 = scmp.eq.s32.totalorder %s11, 1
    %p92 = scmp.ne.s32.totalorder %s87, %s89
    %p93 = scmp.eq.s32.totalorder %s11, 0
    %p94 = por %p92, %p93
    %p95 = scmp.ne.s32.totalorder %s87, %s89
    %p96 = scmp.eq.s32.totalorder %s16, 1
    %p97 = por %p95, %p96
    %p98 = scmp.ne.s32.totalorder %s89, %s90
    %p99 = scmp.eq.s32.totalorder %s16, 0
    %p100 = por %p98, %p99
    %p101 = scmp.ne.s32.totalorder %s89, %s90
    %p102 = scmp.eq.s32.totalorder %s17, 1
    %p103 = por %p101, %p102
    %p105 = scmp.ne.s32.totalorder %s90, %s104
    %p106 = scmp.eq.s32.totalorder %s17, 0
    %p107 = por %p105, %p106
    %s109 = sadd.s32 %s108, 1
    %p112 = scmp.eq.s32.totalorder %s11, 1
    %p113 = scmp.ne.s32.totalorder %s108, %s110
    %p114 = scmp.eq.s32.totalorder %s11, 0
    %p115 = por %p113, %p114
    %p116 = scmp.ne.s32.totalorder %s108, %s110
    %p117 = scmp.eq.s32.totalorder %s16, 1
    %p118 = por %p116, %p117
    %p119 = scmp.ne.s32.totalorder %s110, %s111
    %p120 = scmp.eq.s32.totalorder %s16, 0
    %p121 = por %p119, %p120
    %p122 = scmp.ne.s32.totalorder %s110, %s111
    %p123 = scmp.eq.s32.totalorder %s17, 1
    %p124 = por %p122, %p123
    %p126 = scmp.ne.s32.totalorder %s111, %s125
    %p127 = scmp.eq.s32.totalorder %s17, 0
    %p128 = por %p126, %p127
    %s129 = ssub.s32 %s11, %s18
    %p130 = scmp.eq.s32.totalorder %s129, 0
    %s132 = sadd.s32 %s131, 1
    %s133 = scalar_select %p130, %s131, %s132
    %p136 = pneg %p130
    %p137 = scmp.eq.s32.totalorder %s11, 1
    %p138 = por %p136, %p137
    %p139 = scmp.ne.s32.totalorder %s131, %s134
    %p140 = scmp.eq.s32.totalorder %s11, 0
    %p141 = por %p139, %p140
    %p142 = scmp.ne.s32.totalorder %s131, %s134
    %p143 = scmp.eq.s32.totalorder %s16, 1
    %p144 = por %p142, %p143
    %p145 = scmp.ne.s32.totalorder %s134, %s135
    %p146 = scmp.eq.s32.totalorder %s16, 0
    %p147 = por %p145, %p146
    %p148 = scmp.ne.s32.totalorder %s134, %s135
    %p149 = scmp.eq.s32.totalorder %s17, 1
    %p150 = por %p148, %p149
    %p152 = scmp.ne.s32.totalorder %s135, %s151
    %p153 = scmp.eq.s32.totalorder %s17, 0
    %p154 = por %p152, %p153
    %p155 = scmp.le.s32.totalorder 1, %s11
    %p156 = scmp.lt.s32.totalorder %s11, 3
    %p157 = pnand %p155, %p156
    %p158 = pneg %p157
    // Predicated region
    $region9: #{tpu_custom_call.1} parent=5 // pred_check
      _
    $region10: #{tpu_custom_call.1} parent=5 // pred_check_branch
      %160 = sbr.rel (%p157) target = $region12
    $region11: #{tpu_custom_call.1} parent=5 // pred_region
      %s161 = ssub.s32 %s11, 1
      // Predicated region
      $region13: #{tpu_custom_call.1} parent=11 // pred_check
        %p162 = pneg %p58
      $region14: #{tpu_custom_call.1} parent=11 // pred_check_branch
        %164 = sbr.rel (%p162) target = $region16
      $region15: #{tpu_custom_call.1} parent=11 // pred_region
        _
      $region16: #{tpu_custom_call.1} parent=11 // pred_fallthru
        _
      // Predicated region
      $region17: #{tpu_custom_call.1} parent=11 // pred_check
        %p165 = pneg %p79
      $region18: #{tpu_custom_call.1} parent=11 // pred_check_branch
        %167 = sbr.rel (%p165) target = $region20
      $region19: #{tpu_custom_call.1} parent=11 // pred_region
        _
      $region20: #{tpu_custom_call.1} parent=11 // pred_fallthru
        _
      // Predicated region
      $region21: #{tpu_custom_call.1} parent=11 // pred_check
        %p168 = pneg %p100
      $region22: #{tpu_custom_call.1} parent=11 // pred_check_branch
        %170 = sbr.rel (%p168) target = $region24
      $region23: #{tpu_custom_call.1} parent=11 // pred_region
        _
      $region24: #{tpu_custom_call.1} parent=11 // pred_fallthru
        _
      // Predicated region
      $region25: #{tpu_custom_call.1} parent=11 // pred_check
        %p171 = pneg %p121
      $region26: #{tpu_custom_call.1} parent=11 // pred_check_branch
        %173 = sbr.rel (%p171) target = $region28
      $region27: #{tpu_custom_call.1} parent=11 // pred_region
        _
      $region28: #{tpu_custom_call.1} parent=11 // pred_fallthru
        _
    $region12: #{tpu_custom_call.1} parent=5 // pred_fallthru
      _
    %p174 = scmp.lt.s32.totalorder %s11, 2
    // Predicated region
    $region29: #{tpu_custom_call.1} parent=5 // pred_check
      %p175 = pneg %p174
    $region30: #{tpu_custom_call.1} parent=5 // pred_check_branch
      %177 = sbr.rel (%p175) target = $region32
    $region31: #{tpu_custom_call.1} parent=5 // pred_region
      // Predicated region
      $region33: #{tpu_custom_call.1} parent=31 // pred_check
        %p178 = pneg %p31
      $region34: #{tpu_custom_call.1} parent=31 // pred_check_branch
        %180 = sbr.rel (%p178) target = $region36
      $region35: #{tpu_custom_call.1} parent=31 // pred_region
        %s181 = smul.u32 32, %s11
        %p182 = scmp.lt.s32.totalorder %s181, 63
        %s183 = scalar_select %p182, %s181, 63
        %s184 = smul.addr %s183, 4
        %s185 = scalar_lea.vmem %s0, %s184
        %s186 = smul.u32 32, %s11
      $region36: #{tpu_custom_call.1} parent=31 // pred_fallthru
        _
    $region32: #{tpu_custom_call.1} parent=5 // pred_fallthru
      _
    %p187 = scmp.le.s32.totalorder 1, %s11
    %p188 = scmp.lt.s32.totalorder %s11, 3
    %p189 = pnand %p187, %p188
    %p190 = pneg %p189
    // Predicated region
    $region37: #{tpu_custom_call.1} parent=5 // pred_check
      _
    $region38: #{tpu_custom_call.1} parent=5 // pred_check_branch
      %192 = sbr.rel (%p189) target = $region40
    $region39: #{tpu_custom_call.1} parent=5 // pred_region
      %s193 = ssub.s32 %s11, 1
      %s194 = smul.u32 32, %s16
      %p195 = scmp.lt.s32.totalorder %s194, 63
      %s196 = scalar_select %p195, %s194, 63
      %s197 = smul.addr %s196, 4
      %s198 = scalar_lea.vmem %s0, %s197
      %p199 = pneg %p37
      %p200 = pneg %p34
      %p201 = pneg %p58
      %p202 = pneg %p55
      %p203 = pneg %p79
      %p204 = pneg %p76
      %p205 = pneg %p100
      %p206 = pneg %p97
      %p207 = pneg %p121
      %p208 = pneg %p118
      %p209 = pneg %p147
      %p210 = pneg %p144
      %s211 = smul.u32 32, %s16
      %p212 = scmp.lt.s32.totalorder %s211, 63
      %s213 = scalar_select %p212, %s211, 63
      %s214 = smul.addr %s213, 8
      %s215 = scalar_lea.vmem %s5, %s214
      %s216 = smul.u32 32, %s16
      %p217 = scmp.lt.s32.totalorder %s216, 63
      %s218 = scalar_select %p217, %s216, 63
      %s219 = smul.addr %s218, 4
      %s220 = scalar_lea.vmem %s0, %s219
      %s221 = smul.u32 32, %s16
      %s222 = smul.u32 32, %s16
      %p223 = scmp.lt.s32.totalorder %s222, 63
      %s224 = scalar_select %p223, %s222, 63
      %s225 = smul.addr %s224, 8
      %s226 = scalar_lea.vmem %s5, %s225
      %s227 = smul.u32 32, %s16
      %v229 = vld [vmem:[%s220] sm:$0xf]
      %v230 = vld [vmem:[%s220 + $0x4] sm:$0xf]
      %v231 = vld [vmem:[%s220 + $0x8] sm:$0xf]
      %v232 = vld [vmem:[%s220 + $0xc] sm:$0xf]
      %v233 = vld [vmem:[%s220 + $0x10] sm:$0xf]
      %v234 = vld [vmem:[%s220 + $0x14] sm:$0xf]
      %v235 = vld [vmem:[%s220 + $0x18] sm:$0xf]
      %v236 = vld [vmem:[%s220 + $0x1c] sm:$0xf]
      %v237 = vld [vmem:[%s220 + $0x20] sm:$0xf]
      %v238 = vld [vmem:[%s220 + $0x24] sm:$0xf]
      %v239 = vld [vmem:[%s220 + $0x28] sm:$0xf]
      %v240 = vld [vmem:[%s220 + $0x2c] sm:$0xf]
      %v241 = vld [vmem:[%s220 + $0x30] sm:$0xf]
      %v242 = vld [vmem:[%s220 + $0x34] sm:$0xf]
      %v243 = vld [vmem:[%s220 + $0x38] sm:$0xf]
      %v244 = vld [vmem:[%s220 + $0x3c] sm:$0xf]
      %v245 = vld [vmem:[%s220 + $0x40] sm:$0xf]
      %v246 = vld [vmem:[%s220 + $0x44] sm:$0xf]
      %v247 = vld [vmem:[%s220 + $0x48] sm:$0xf]
      %v248 = vld [vmem:[%s220 + $0x4c] sm:$0xf]
      %v249 = vld [vmem:[%s220 + $0x50] sm:$0xf]
      %v250 = vld [vmem:[%s220 + $0x54] sm:$0xf]
      %v251 = vld [vmem:[%s220 + $0x58] sm:$0xf]
      %v252 = vld [vmem:[%s220 + $0x5c] sm:$0xf]
      %v253 = vld [vmem:[%s220 + $0x60] sm:$0xf]
      %v254 = vld [vmem:[%s220 + $0x64] sm:$0xf]
      %v255 = vld [vmem:[%s220 + $0x68] sm:$0xf]
      %v256 = vld [vmem:[%s220 + $0x6c] sm:$0xf]
      %v257 = vld [vmem:[%s220 + $0x70] sm:$0xf]
      %v258 = vld [vmem:[%s220 + $0x74] sm:$0xf]
      %v259 = vld [vmem:[%s220 + $0x78] sm:$0xf]
      %v260 = vld [vmem:[%s220 + $0x7c] sm:$0xf]
      %v261 = vld [vmem:[%s1] sm:$0xf]
      %v262 = vld [vmem:[%s1 + $0x4] sm:$0xf]
      %v263 = vld [vmem:[%s1 + $0x8] sm:$0xf]
      %v264 = vld [vmem:[%s1 + $0xc] sm:$0xf]
      %v265 = vld [vmem:[%s1 + $0x10] sm:$0xf]
      %v266 = vld [vmem:[%s2] sm:$0x1]
      %v268 = vlaneseq
      %v269 = vshrl.u32 %v268, 7
      %v270 = vsub.s32 0, %v269
      %v271 = vrot.slane %v266, %v270
      %v305 = vunpack.c.l.b16 %v229
      %v306 = vunpack.c.l.b16 %v230
      %v307 = vunpack.c.l.b16 %v231
      %v308 = vunpack.c.l.b16 %v232
      %v309 = vunpack.c.l.b16 %v233
      %v310 = vunpack.c.l.b16 %v234
      %v311 = vunpack.c.l.b16 %v235
      %v312 = vunpack.c.l.b16 %v236
      %v313 = vunpack.c.l.b16 %v237
      %v314 = vunpack.c.l.b16 %v238
      %v315 = vunpack.c.l.b16 %v239
      %v316 = vunpack.c.l.b16 %v240
      %v317 = vunpack.c.l.b16 %v241
      %v318 = vunpack.c.l.b16 %v242
      %v319 = vunpack.c.l.b16 %v243
      %v320 = vunpack.c.l.b16 %v244
      %v321 = vunpack.c.l.b16 %v245
      %v322 = vunpack.c.l.b16 %v246
      %v323 = vunpack.c.l.b16 %v247
      %v324 = vunpack.c.l.b16 %v248
      %v325 = vunpack.c.l.b16 %v249
      %v326 = vunpack.c.l.b16 %v250
      %v327 = vunpack.c.l.b16 %v251
      %v328 = vunpack.c.l.b16 %v252
      %v329 = vunpack.c.l.b16 %v253
      %v330 = vunpack.c.l.b16 %v254
      %v331 = vunpack.c.l.b16 %v255
      %v332 = vunpack.c.l.b16 %v256
      %v333 = vunpack.c.l.b16 %v257
      %v334 = vunpack.c.l.b16 %v258
      %v335 = vunpack.c.l.b16 %v259
      %v336 = vunpack.c.l.b16 %v260
      %v337 = vpack.c.b16 %v306, %v305
      %v338 = vpack.c.b16 %v308, %v307
      %v339 = vpack.c.b16 %v310, %v309
      %v340 = vpack.c.b16 %v312, %v311
      %v341 = vpack.c.b16 %v314, %v313
      %v342 = vpack.c.b16 %v316, %v315
      %v343 = vpack.c.b16 %v318, %v317
      %v344 = vpack.c.b16 %v320, %v319
      %v345 = vpack.c.b16 %v322, %v321
      %v346 = vpack.c.b16 %v324, %v323
      %v347 = vpack.c.b16 %v326, %v325
      %v348 = vpack.c.b16 %v328, %v327
      %v349 = vpack.c.b16 %v330, %v329
      %v350 = vpack.c.b16 %v332, %v331
      %v351 = vpack.c.b16 %v334, %v333
      %v352 = vpack.c.b16 %v336, %v335
      %v358 = vunpack.c.l.b16 %v261
      %v359 = vunpack.c.l.b16 %v262
      %v360 = vunpack.c.l.b16 %v263
      %v361 = vunpack.c.l.b16 %v264
      %v362 = vunpack.c.l.b16 %v265
      %v363 = vpack.c.b16 %v359, %v358
      %v364 = vpack.c.b16 %v361, %v360
      %v365 = vpack.c.b16 %v362, %v362
      %vm368 = vcmask 326656
      %v370 = vsel %vm368, %v337, 0
      %v373 = vsel %vm368, %v338, 0
      %v376 = vsel %vm368, %v339, 0
      %v379 = vsel %vm368, %v340, 0
      %v382 = vsel %vm368, %v341, 0
      %v385 = vsel %vm368, %v342, 0
      %v388 = vsel %vm368, %v343, 0
      %v391 = vsel %vm368, %v344, 0
      %v394 = vsel %vm368, %v345, 0
      %v397 = vsel %vm368, %v346, 0
      %v400 = vsel %vm368, %v347, 0
      %v403 = vsel %vm368, %v348, 0
      %v406 = vsel %vm368, %v349, 0
      %v409 = vsel %vm368, %v350, 0
      %v412 = vsel %vm368, %v351, 0
      %v415 = vsel %vm368, %v352, 0
      %vm417 = vcmask 1043456
      %v419 = vsel %vm417, %v365, 0
      %421 = vmatprep.subr.bf16.mxu0 0
      %422 = vmatpush1.bf16.msra.mxu0 %v363
      %423 = vmatprep.subr.bf16.mxu0 0
      %424 = vmatpush1.bf16.msra.mxu0 %v364
      %425 = vmatprep.subr.bf16.mxu0 0
      %426 = vmatpush1.bf16.msra.mxu0 %v419
      %427 = vmatprep.subr.bf16.mxu0 0
      %428 = vmatpush1.bf16.msra.mxu0 0
      %429 = vmatprep.subr.bf16.mxu0 0
      %430 = vmatpush1.bf16.msra.mxu0 0
      %431 = vmatprep.subr.bf16.mxu0 0
      %432 = vmatpush1.bf16.msra.mxu0 0
      %433 = vmatprep.subr.bf16.mxu0 0
      %434 = vmatpush1.bf16.msra.mxu0 0
      %435 = vmatprep.subr.bf16.mxu0 0
      %436 = vmatpush1.bf16.msra.mxu0 0
      %437 = vmatprep.subr.bf16.mxu0 0
      %438 = vmatpush1.bf16.msra.mxu0 0
      %439 = vmatprep.subr.bf16.mxu0 0
      %440 = vmatpush1.bf16.msra.mxu0 0
      %441 = vmatprep.subr.bf16.mxu0 0
      %442 = vmatpush1.bf16.msra.mxu0 0
      %443 = vmatprep.subr.bf16.mxu0 0
      %444 = vmatpush1.bf16.msra.mxu0 0
      %445 = vmatprep.subr.bf16.mxu0 0
      %446 = vmatpush1.bf16.msra.mxu0 0
      %447 = vmatprep.subr.bf16.mxu0 0
      %448 = vmatpush1.bf16.msra.mxu0 0
      %449 = vmatprep.subr.bf16.mxu0 0
      %450 = vmatpush1.bf16.msra.mxu0 0
      %451 = vmatprep.subr.bf16.mxu0 0
      %452 = vmatpush1.bf16.msra.mxu0 0
      %453 = vmatprep.mubr.bf16.mxu0 0
      %454 = vmatmul.mubr.bf16.gmra.mrb[0].mxu0 %v370
      %v455 = vpop.f32.mrb[0].mxu0
      %v456 = vadd.f32 %v271, %v455
      %v457 = vpop.f32.mrb[0].mxu0
      %v458 = vpop.f32.mrb[0].mxu0
      %v459 = vadd.f32 %v271, %v458
      %v460 = vpop.f32.mrb[0].mxu0
      %461 = vmatprep.mubr.bf16.mxu0 0
      %462 = vmatmul.mubr.bf16.gmra.mrb[0].mxu0 %v373
      %v463 = vpop.f32.mrb[0].mxu0
      %v464 = vadd.f32 %v271, %v463
      %v465 = vpop.f32.mrb[0].mxu0
      %v466 = vpop.f32.mrb[0].mxu0
      %v467 = vadd.f32 %v271, %v466
      %v468 = vpop.f32.mrb[0].mxu0
      %469 = vmatprep.mubr.bf16.mxu0 0
      %470 = vmatmul.mubr.bf16.gmra.mrb[0].mxu0 %v376
      %v471 = vpop.f32.mrb[0].mxu0
      %v472 = vadd.f32 %v271, %v471
      %v473 = vpop.f32.mrb[0].mxu0
      %v474 = vpop.f32.mrb[0].mxu0
      %v475 = vadd.f32 %v271, %v474
      %v476 = vpop.f32.mrb[0].mxu0
      %477 = vmatprep.mubr.bf16.mxu0 0
      %478 = vmatmul.mubr.bf16.gmra.mrb[0].mxu0 %v379
      %v479 = vpop.f32.mrb[0].mxu0
      %v480 = vadd.f32 %v271, %v479
      %v481 = vpop.f32.mrb[0].mxu0
      %v482 = vpop.f32.mrb[0].mxu0
      %v483 = vadd.f32 %v271, %v482
      %v484 = vpop.f32.mrb[0].mxu0
      %485 = vmatprep.mubr.bf16.mxu0 0
      %486 = vmatmul.mubr.bf16.gmra.mrb[0].mxu0 %v382
      %v487 = vpop.f32.mrb[0].mxu0
      %v488 = vadd.f32 %v271, %v487
      %v489 = vpop.f32.mrb[0].mxu0
      %v490 = vpop.f32.mrb[0].mxu0
      %v491 = vadd.f32 %v271, %v490
      %v492 = vpop.f32.mrb[0].mxu0
      %493 = vmatprep.mubr.bf16.mxu0 0
      %494 = vmatmul.mubr.bf16.gmra.mrb[0].mxu0 %v385
      %v495 = vpop.f32.mrb[0].mxu0
      %v496 = vadd.f32 %v271, %v495
      %v497 = vpop.f32.mrb[0].mxu0
      %v498 = vpop.f32.mrb[0].mxu0
      %v499 = vadd.f32 %v271, %v498
      %v500 = vpop.f32.mrb[0].mxu0
      %501 = vmatprep.mubr.bf16.mxu0 0
      %502 = vmatmul.mubr.bf16.gmra.mrb[0].mxu0 %v388
      %v503 = vpop.f32.mrb[0].mxu0
      %v504 = vadd.f32 %v271, %v503
      %v505 = vpop.f32.mrb[0].mxu0
      %v506 = vpop.f32.mrb[0].mxu0
      %v507 = vadd.f32 %v271, %v506
      %v508 = vpop.f32.mrb[0].mxu0
      %509 = vmatprep.mubr.bf16.mxu0 0
      %510 = vmatmul.mubr.bf16.gmra.mrb[0].mxu0 %v391
      %v511 = vpop.f32.mrb[0].mxu0
      %v512 = vadd.f32 %v271, %v511
      %v513 = vpop.f32.mrb[0].mxu0
      %v514 = vpop.f32.mrb[0].mxu0
      %v515 = vadd.f32 %v271, %v514
      %v516 = vpop.f32.mrb[0].mxu0
      %517 = vmatprep.mubr.bf16.mxu0 0
      %518 = vmatmul.mubr.bf16.gmra.mrb[0].mxu0 %v394
      %v519 = vpop.f32.mrb[0].mxu0
      %v520 = vadd.f32 %v271, %v519
      %v521 = vpop.f32.mrb[0].mxu0
      %v522 = vpop.f32.mrb[0].mxu0
      %v523 = vadd.f32 %v271, %v522
      %v524 = vpop.f32.mrb[0].mxu0
      %525 = vmatprep.mubr.bf16.mxu0 0
      %526 = vmatmul.mubr.bf16.gmra.mrb[0].mxu0 %v397
      %v527 = vpop.f32.mrb[0].mxu0
      %v528 = vadd.f32 %v271, %v527
      %v529 = vpop.f32.mrb[0].mxu0
      %v530 = vpop.f32.mrb[0].mxu0
      %v531 = vadd.f32 %v271, %v530
      %v532 = vpop.f32.mrb[0].mxu0
      %533 = vmatprep.mubr.bf16.mxu0 0
      %534 = vmatmul.mubr.bf16.gmra.mrb[0].mxu0 %v400
      %v535 = vpop.f32.mrb[0].mxu0
      %v536 = vadd.f32 %v271, %v535
      %v537 = vpop.f32.mrb[0].mxu0
      %v538 = vpop.f32.mrb[0].mxu0
      %v539 = vadd.f32 %v271, %v538
      %v540 = vpop.f32.mrb[0].mxu0
      %541 = vmatprep.mubr.bf16.mxu0 0
      %542 = vmatmul.mubr.bf16.gmra.mrb[0].mxu0 %v403
      %v543 = vpop.f32.mrb[0].mxu0
      %v544 = vadd.f32 %v271, %v543
      %v545 = vpop.f32.mrb[0].mxu0
      %v546 = vpop.f32.mrb[0].mxu0
      %v547 = vadd.f32 %v271, %v546
      %v548 = vpop.f32.mrb[0].mxu0
      %549 = vmatprep.mubr.bf16.mxu0 0
      %550 = vmatmul.mubr.bf16.gmra.mrb[0].mxu0 %v406
      %v551 = vpop.f32.mrb[0].mxu0
      %v552 = vadd.f32 %v271, %v551
      %v553 = vpop.f32.mrb[0].mxu0
      %v554 = vpop.f32.mrb[0].mxu0
      %v555 = vadd.f32 %v271, %v554
      %v556 = vpop.f32.mrb[0].mxu0
      %557 = vmatprep.mubr.bf16.mxu0 0
      %558 = vmatmul.mubr.bf16.gmra.mrb[0].mxu0 %v409
      %v559 = vpop.f32.mrb[0].mxu0
      %v560 = vadd.f32 %v271, %v559
      %v561 = vpop.f32.mrb[0].mxu0
      %v562 = vpop.f32.mrb[0].mxu0
      %v563 = vadd.f32 %v271, %v562
      %v564 = vpop.f32.mrb[0].mxu0
      %565 = vmatprep.mubr.bf16.mxu0 0
      %566 = vmatmul.mubr.bf16.gmra.mrb[0].mxu0 %v412
      %v567 = vpop.f32.mrb[0].mxu0
      %v568 = vadd.f32 %v271, %v567
      %v569 = vpop.f32.mrb[0].mxu0
      %v570 = vpop.f32.mrb[0].mxu0
      %v571 = vadd.f32 %v271, %v570
      %v572 = vpop.f32.mrb[0].mxu0
      %573 = vmatprep.mubr.bf16.mxu0 0
      %574 = vmatmul.mubr.bf16.gmra.mrb[0].mxu0 %v415
      %v575 = vpop.f32.mrb[0].mxu0
      %v576 = vadd.f32 %v271, %v575
      %v577 = vpop.f32.mrb[0].mxu0
      %v578 = vpop.f32.mrb[0].mxu0
      %v579 = vadd.f32 %v271, %v578
      %v580 = vpop.f32.mrb[0].mxu0
      %581 = vdwg.mxu0
      %v582 = vmax.f32 %v456, 0.0
      %v583 = vmax.f32 %v459, 0.0
      %v584 = vmax.f32 %v464, 0.0
      %v585 = vmax.f32 %v467, 0.0
      %v586 = vmax.f32 %v472, 0.0
      %v587 = vmax.f32 %v475, 0.0
      %v588 = vmax.f32 %v480, 0.0
      %v589 = vmax.f32 %v483, 0.0
      %v590 = vmax.f32 %v488, 0.0
      %v591 = vmax.f32 %v491, 0.0
      %v592 = vmax.f32 %v496, 0.0
      %v593 = vmax.f32 %v499, 0.0
      %v594 = vmax.f32 %v504, 0.0
      %v595 = vmax.f32 %v507, 0.0
      %v596 = vmax.f32 %v512, 0.0
      %v597 = vmax.f32 %v515, 0.0
      %v598 = vmax.f32 %v520, 0.0
      %v599 = vmax.f32 %v523, 0.0
      %v600 = vmax.f32 %v528, 0.0
      %v601 = vmax.f32 %v531, 0.0
      %v602 = vmax.f32 %v536, 0.0
      %v603 = vmax.f32 %v539, 0.0
      %v604 = vmax.f32 %v544, 0.0
      %v605 = vmax.f32 %v547, 0.0
      %v606 = vmax.f32 %v552, 0.0
      %v607 = vmax.f32 %v555, 0.0
      %v608 = vmax.f32 %v560, 0.0
      %v609 = vmax.f32 %v563, 0.0
      %v610 = vmax.f32 %v568, 0.0
      %v611 = vmax.f32 %v571, 0.0
      %v612 = vmax.f32 %v576, 0.0
      %v613 = vmax.f32 %v579, 0.0
      %v614 = vpack.c.bf16 %v583, %v582
      %v615 = vpack.c.bf16 %v585, %v584
      %v616 = vpack.c.bf16 %v587, %v586
      %v617 = vpack.c.bf16 %v589, %v588
      %v618 = vpack.c.bf16 %v591, %v590
      %v619 = vpack.c.bf16 %v593, %v592
      %v620 = vpack.c.bf16 %v595, %v594
      %v621 = vpack.c.bf16 %v597, %v596
      %v622 = vpack.c.bf16 %v599, %v598
      %v623 = vpack.c.bf16 %v601, %v600
      %v624 = vpack.c.bf16 %v603, %v602
      %v625 = vpack.c.bf16 %v605, %v604
      %v626 = vpack.c.bf16 %v607, %v606
      %v627 = vpack.c.bf16 %v609, %v608
      %v628 = vpack.c.bf16 %v611, %v610
      %v629 = vpack.c.bf16 %v613, %v612
      %v630 = vld [vmem:[%s3] sm:$0xf]
      %v631 = vld [vmem:[%s3 + $0x4] sm:$0xf]
      %v632 = vld [vmem:[%s3 + $0x8] sm:$0xf]
      %v633 = vld [vmem:[%s3 + $0xc] sm:$0xf]
      %v634 = vld [vmem:[%s3 + $0x10] sm:$0xf]
      %v635 = vld [vmem:[%s3 + $0x14] sm:$0xf]
      %v636 = vld [vmem:[%s3 + $0x18] sm:$0xf]
      %v637 = vld [vmem:[%s3 + $0x1c] sm:$0xf]
      %v638 = vld [vmem:[%s3 + $0x20] sm:$0xf]
      %v639 = vld [vmem:[%s3 + $0x24] sm:$0xf]
      %v640 = vld [vmem:[%s3 + $0x28] sm:$0xf]
      %v641 = vld [vmem:[%s3 + $0x2c] sm:$0xf]
      %v642 = vld [vmem:[%s3 + $0x30] sm:$0xf]
      %v643 = vld [vmem:[%s3 + $0x34] sm:$0xf]
      %v644 = vld [vmem:[%s3 + $0x38] sm:$0xf]
      %v645 = vld [vmem:[%s3 + $0x3c] sm:$0xf]
      %v646 = vld [vmem:[%s4] sm:$0x1]
      %v648 = vlaneseq
      %v649 = vshrl.u32 %v648, 7
      %v650 = vsub.s32 0, %v649
      %v651 = vrot.slane %v646, %v650
      %v669 = vunpack.c.l.b16 %v630
      %v670 = vunpack.c.l.b16 %v631
      %v671 = vunpack.c.l.b16 %v632
      %v672 = vunpack.c.l.b16 %v633
      %v673 = vunpack.c.l.b16 %v634
      %v674 = vunpack.c.l.b16 %v635
      %v675 = vunpack.c.l.b16 %v636
      %v676 = vunpack.c.l.b16 %v637
      %v677 = vunpack.c.l.b16 %v638
      %v678 = vunpack.c.l.b16 %v639
      %v679 = vunpack.c.l.b16 %v640
      %v680 = vunpack.c.l.b16 %v641
      %v681 = vunpack.c.l.b16 %v642
      %v682 = vunpack.c.l.b16 %v643
      %v683 = vunpack.c.l.b16 %v644
      %v684 = vunpack.c.l.b16 %v645
      %v685 = vpack.c.b16 %v670, %v669
      %v686 = vpack.c.b16 %v672, %v671
      %v687 = vpack.c.b16 %v674, %v673
      %v688 = vpack.c.b16 %v676, %v675
      %v689 = vpack.c.b16 %v678, %v677
      %v690 = vpack.c.b16 %v680, %v679
      %v691 = vpack.c.b16 %v682, %v681
      %v692 = vpack.c.b16 %v684, %v683
      %701 = vmatprep.subr.bf16.mxu0 0
      %702 = vmatpush1.bf16.msra.mxu0 %v685
      %703 = vmatprep.subr.bf16.mxu0 0
      %704 = vmatpush1.bf16.msra.mxu0 %v686
      %705 = vmatprep.subr.bf16.mxu0 0
      %706 = vmatpush1.bf16.msra.mxu0 %v687
      %707 = vmatprep.subr.bf16.mxu0 0
      %708 = vmatpush1.bf16.msra.mxu0 %v688
      %709 = vmatprep.subr.bf16.mxu0 0
      %710 = vmatpush1.bf16.msra.mxu0 %v689
      %711 = vmatprep.subr.bf16.mxu0 0
      %712 = vmatpush1.bf16.msra.mxu0 %v690
      %713 = vmatprep.subr.bf16.mxu0 0
      %714 = vmatpush1.bf16.msra.mxu0 %v691
      %715 = vmatprep.subr.bf16.mxu0 0
      %716 = vmatpush1.bf16.msra.mxu0 %v692
      %717 = vmatprep.subr.bf16.mxu0 0
      %718 = vmatpush1.bf16.msra.mxu0 0
      %719 = vmatprep.subr.bf16.mxu0 0
      %720 = vmatpush1.bf16.msra.mxu0 0
      %721 = vmatprep.subr.bf16.mxu0 0
      %722 = vmatpush1.bf16.msra.mxu0 0
      %723 = vmatprep.subr.bf16.mxu0 0
      %724 = vmatpush1.bf16.msra.mxu0 0
      %725 = vmatprep.subr.bf16.mxu0 0
      %726 = vmatpush1.bf16.msra.mxu0 0
      %727 = vmatprep.subr.bf16.mxu0 0
      %728 = vmatpush1.bf16.msra.mxu0 0
      %729 = vmatprep.subr.bf16.mxu0 0
      %730 = vmatpush1.bf16.msra.mxu0 0
      %731 = vmatprep.subr.bf16.mxu0 0
      %732 = vmatpush1.bf16.msra.mxu0 0
      %733 = vmatprep.mubr.bf16.mxu0 0
      %734 = vmatmul.mubr.bf16.gmra.mrb[0].mxu0 %v614
      %v735 = vpop.f32.mrb[0].mxu0
      %v736 = vadd.f32 %v651, %v735
      %v737 = vpop.f32.mrb[0].mxu0
      %v738 = vpop.f32.mrb[0].mxu0
      %v739 = vadd.f32 %v651, %v738
      %v740 = vpop.f32.mrb[0].mxu0
      %741 = vmatprep.mubr.bf16.mxu0 0
      %742 = vmatmul.mubr.bf16.gmra.mrb[0].mxu0 %v615
      %v743 = vpop.f32.mrb[0].mxu0
      %v744 = vadd.f32 %v651, %v743
      %v745 = vpop.f32.mrb[0].mxu0
      %v746 = vpop.f32.mrb[0].mxu0
      %v747 = vadd.f32 %v651, %v746
      %v748 = vpop.f32.mrb[0].mxu0
      %749 = vmatprep.mubr.bf16.mxu0 0
      %750 = vmatmul.mubr.bf16.gmra.mrb[0].mxu0 %v616
      %v751 = vpop.f32.mrb[0].mxu0
      %v752 = vadd.f32 %v651, %v751
      %v753 = vpop.f32.mrb[0].mxu0
      %v754 = vpop.f32.mrb[0].mxu0
      %v755 = vadd.f32 %v651, %v754
      %v756 = vpop.f32.mrb[0].mxu0
      %757 = vmatprep.mubr.bf16.mxu0 0
      %758 = vmatmul.mubr.bf16.gmra.mrb[0].mxu0 %v617
      %v759 = vpop.f32.mrb[0].mxu0
      %v760 = vadd.f32 %v651, %v759
      %v761 = vpop.f32.mrb[0].mxu0
      %v762 = vpop.f32.mrb[0].mxu0
      %v763 = vadd.f32 %v651, %v762
      %v764 = vpop.f32.mrb[0].mxu0
      %765 = vmatprep.mubr.bf16.mxu0 0
      %766 = vmatmul.mubr.bf16.gmra.mrb[0].mxu0 %v618
      %v767 = vpop.f32.mrb[0].mxu0
      %v768 = vadd.f32 %v651, %v767
      %v769 = vpop.f32.mrb[0].mxu0
      %v770 = vpop.f32.mrb[0].mxu0
      %v771 = vadd.f32 %v651, %v770
      %v772 = vpop.f32.mrb[0].mxu0
      %773 = vmatprep.mubr.bf16.mxu0 0
      %774 = vmatmul.mubr.bf16.gmra.mrb[0].mxu0 %v619
      %v775 = vpop.f32.mrb[0].mxu0
      %v776 = vadd.f32 %v651, %v775
      %v777 = vpop.f32.mrb[0].mxu0
      %v778 = vpop.f32.mrb[0].mxu0
      %v779 = vadd.f32 %v651, %v778
      %v780 = vpop.f32.mrb[0].mxu0
      %781 = vmatprep.mubr.bf16.mxu0 0
      %782 = vmatmul.mubr.bf16.gmra.mrb[0].mxu0 %v620
      %v783 = vpop.f32.mrb[0].mxu0
      %v784 = vadd.f32 %v651, %v783
      %v785 = vpop.f32.mrb[0].mxu0
      %v786 = vpop.f32.mrb[0].mxu0
      %v787 = vadd.f32 %v651, %v786
      %v788 = vpop.f32.mrb[0].mxu0
      %789 = vmatprep.mubr.bf16.mxu0 0
      %790 = vmatmul.mubr.bf16.gmra.mrb[0].mxu0 %v621
      %v791 = vpop.f32.mrb[0].mxu0
      %v792 = vadd.f32 %v651, %v791
      %v793 = vpop.f32.mrb[0].mxu0
      %v794 = vpop.f32.mrb[0].mxu0
      %v795 = vadd.f32 %v651, %v794
      %v796 = vpop.f32.mrb[0].mxu0
      %797 = vmatprep.mubr.bf16.mxu0 0
      %798 = vmatmul.mubr.bf16.gmra.mrb[0].mxu0 %v622
      %v799 = vpop.f32.mrb[0].mxu0
      %v800 = vadd.f32 %v651, %v799
      %v801 = vpop.f32.mrb[0].mxu0
      %v802 = vpop.f32.mrb[0].mxu0
      %v803 = vadd.f32 %v651, %v802
      %v804 = vpop.f32.mrb[0].mxu0
      %805 = vmatprep.mubr.bf16.mxu0 0
      %806 = vmatmul.mubr.bf16.gmra.mrb[0].mxu0 %v623
      %v807 = vpop.f32.mrb[0].mxu0
      %v808 = vadd.f32 %v651, %v807
      %v809 = vpop.f32.mrb[0].mxu0
      %v810 = vpop.f32.mrb[0].mxu0
      %v811 = vadd.f32 %v651, %v810
      %v812 = vpop.f32.mrb[0].mxu0
      %813 = vmatprep.mubr.bf16.mxu0 0
      %814 = vmatmul.mubr.bf16.gmra.mrb[0].mxu0 %v624
      %v815 = vpop.f32.mrb[0].mxu0
      %v816 = vadd.f32 %v651, %v815
      %v817 = vpop.f32.mrb[0].mxu0
      %v818 = vpop.f32.mrb[0].mxu0
      %v819 = vadd.f32 %v651, %v818
      %v820 = vpop.f32.mrb[0].mxu0
      %821 = vmatprep.mubr.bf16.mxu0 0
      %822 = vmatmul.mubr.bf16.gmra.mrb[0].mxu0 %v625
      %v823 = vpop.f32.mrb[0].mxu0
      %v824 = vadd.f32 %v651, %v823
      %v825 = vpop.f32.mrb[0].mxu0
      %v826 = vpop.f32.mrb[0].mxu0
      %v827 = vadd.f32 %v651, %v826
      %v828 = vpop.f32.mrb[0].mxu0
      %829 = vmatprep.mubr.bf16.mxu0 0
      %830 = vmatmul.mubr.bf16.gmra.mrb[0].mxu0 %v626
      %v831 = vpop.f32.mrb[0].mxu0
      %v832 = vadd.f32 %v651, %v831
      %v833 = vpop.f32.mrb[0].mxu0
      %v834 = vpop.f32.mrb[0].mxu0
      %v835 = vadd.f32 %v651, %v834
      %v836 = vpop.f32.mrb[0].mxu0
      %837 = vmatprep.mubr.bf16.mxu0 0
      %838 = vmatmul.mubr.bf16.gmra.mrb[0].mxu0 %v627
      %v839 = vpop.f32.mrb[0].mxu0
      %v840 = vadd.f32 %v651, %v839
      %v841 = vpop.f32.mrb[0].mxu0
      %v842 = vpop.f32.mrb[0].mxu0
      %v843 = vadd.f32 %v651, %v842
      %v844 = vpop.f32.mrb[0].mxu0
      %845 = vmatprep.mubr.bf16.mxu0 0
      %846 = vmatmul.mubr.bf16.gmra.mrb[0].mxu0 %v628
      %v847 = vpop.f32.mrb[0].mxu0
      %v848 = vadd.f32 %v651, %v847
      %v849 = vpop.f32.mrb[0].mxu0
      %v850 = vpop.f32.mrb[0].mxu0
      %v851 = vadd.f32 %v651, %v850
      %v852 = vpop.f32.mrb[0].mxu0
      %853 = vmatprep.mubr.bf16.mxu0 0
      %854 = vmatmul.mubr.bf16.gmra.mrb[0].mxu0 %v629
      %v855 = vpop.f32.mrb[0].mxu0
      %v856 = vadd.f32 %v651, %v855
      %v857 = vpop.f32.mrb[0].mxu0
      %v858 = vpop.f32.mrb[0].mxu0
      %v859 = vadd.f32 %v651, %v858
      %v860 = vpop.f32.mrb[0].mxu0
      %861 = vdwg.mxu0
      %v862 = vmax.f32 %v736, 0.0
      %v863 = vmax.f32 %v739, 0.0
      %v864 = vmax.f32 %v744, 0.0
      %v865 = vmax.f32 %v747, 0.0
      %v866 = vmax.f32 %v752, 0.0
      %v867 = vmax.f32 %v755, 0.0
      %v868 = vmax.f32 %v760, 0.0
      %v869 = vmax.f32 %v763, 0.0
      %v870 = vmax.f32 %v768, 0.0
      %v871 = vmax.f32 %v771, 0.0
      %v872 = vmax.f32 %v776, 0.0
      %v873 = vmax.f32 %v779, 0.0
      %v874 = vmax.f32 %v784, 0.0
      %v875 = vmax.f32 %v787, 0.0
      %v876 = vmax.f32 %v792, 0.0
      %v877 = vmax.f32 %v795, 0.0
      %v878 = vmax.f32 %v800, 0.0
      %v879 = vmax.f32 %v803, 0.0
      %v880 = vmax.f32 %v808, 0.0
      %v881 = vmax.f32 %v811, 0.0
      %v882 = vmax.f32 %v816, 0.0
      %v883 = vmax.f32 %v819, 0.0
      %v884 = vmax.f32 %v824, 0.0
      %v885 = vmax.f32 %v827, 0.0
      %v886 = vmax.f32 %v832, 0.0
      %v887 = vmax.f32 %v835, 0.0
      %v888 = vmax.f32 %v840, 0.0
      %v889 = vmax.f32 %v843, 0.0
      %v890 = vmax.f32 %v848, 0.0
      %v891 = vmax.f32 %v851, 0.0
      %v892 = vmax.f32 %v856, 0.0
      %v893 = vmax.f32 %v859, 0.0
      %vm894 = vcmask 261120
      %895 = vst.msk [vmem:[%s226] sm:$0xff] %vm894, %v862
      %896 = vst.msk [vmem:[%s226 + $0x8] sm:$0xff] %vm894, %v863
      %897 = vst.msk [vmem:[%s226 + $0x10] sm:$0xff] %vm894, %v864
      %898 = vst.msk [vmem:[%s226 + $0x18] sm:$0xff] %vm894, %v865
      %899 = vst.msk [vmem:[%s226 + $0x20] sm:$0xff] %vm894, %v866
      %900 = vst.msk [vmem:[%s226 + $0x28] sm:$0xff] %vm894, %v867
      %901 = vst.msk [vmem:[%s226 + $0x30] sm:$0xff] %vm894, %v868
      %902 = vst.msk [vmem:[%s226 + $0x38] sm:$0xff] %vm894, %v869
      %903 = vst.msk [vmem:[%s226 + $0x40] sm:$0xff] %vm894, %v870
      %904 = vst.msk [vmem:[%s226 + $0x48] sm:$0xff] %vm894, %v871
      %905 = vst.msk [vmem:[%s226 + $0x50] sm:$0xff] %vm894, %v872
      %906 = vst.msk [vmem:[%s226 + $0x58] sm:$0xff] %vm894, %v873
      %907 = vst.msk [vmem:[%s226 + $0x60] sm:$0xff] %vm894, %v874
      %908 = vst.msk [vmem:[%s226 + $0x68] sm:$0xff] %vm894, %v875
      %909 = vst.msk [vmem:[%s226 + $0x70] sm:$0xff] %vm894, %v876
      %910 = vst.msk [vmem:[%s226 + $0x78] sm:$0xff] %vm894, %v877
      %911 = vst.msk [vmem:[%s226 + $0x80] sm:$0xff] %vm894, %v878
      %912 = vst.msk [vmem:[%s226 + $0x88] sm:$0xff] %vm894, %v879
      %913 = vst.msk [vmem:[%s226 + $0x90] sm:$0xff] %vm894, %v880
      %914 = vst.msk [vmem:[%s226 + $0x98] sm:$0xff] %vm894, %v881
      %915 = vst.msk [vmem:[%s226 + $0xa0] sm:$0xff] %vm894, %v882
      %916 = vst.msk [vmem:[%s226 + $0xa8] sm:$0xff] %vm894, %v883
      %917 = vst.msk [vmem:[%s226 + $0xb0] sm:$0xff] %vm894, %v884
      %918 = vst.msk [vmem:[%s226 + $0xb8] sm:$0xff] %vm894, %v885
      %919 = vst.msk [vmem:[%s226 + $0xc0] sm:$0xff] %vm894, %v886
      %920 = vst.msk [vmem:[%s226 + $0xc8] sm:$0xff] %vm894, %v887
      %921 = vst.msk [vmem:[%s226 + $0xd0] sm:$0xff] %vm894, %v888
      %922 = vst.msk [vmem:[%s226 + $0xd8] sm:$0xff] %vm894, %v889
      %923 = vst.msk [vmem:[%s226 + $0xe0] sm:$0xff] %vm894, %v890
      %924 = vst.msk [vmem:[%s226 + $0xe8] sm:$0xff] %vm894, %v891
      %925 = vst.msk [vmem:[%s226 + $0xf0] sm:$0xff] %vm894, %v892
      %926 = vst.msk [vmem:[%s226 + $0xf8] sm:$0xff] %vm894, %v893
      %s927 = smul.u32 32, %s16
      %p928 = scmp.lt.s32.totalorder %s927, 63
      %s929 = scalar_select %p928, %s927, 63
      %s930 = smul.addr %s929, 8
      %s931 = scalar_lea.vmem %s5, %s930
      // Predicated region
      $region41: #{tpu_custom_call.1} parent=39 // pred_check
        %p932 = pneg %p144
      $region42: #{tpu_custom_call.1} parent=39 // pred_check_branch
        %934 = sbr.rel (%p932) target = $region44
      $region43: #{tpu_custom_call.1} parent=39 // pred_region
        %s935 = smul.u32 32, %s16
      $region44: #{tpu_custom_call.1} parent=39 // pred_fallthru
        _
    $region40: #{tpu_custom_call.1} parent=5 // pred_fallthru
      _
    %p936 = scmp.le.s32.totalorder 2, %s11
    // Predicated region
    $region45: #{tpu_custom_call.1} parent=5 // pred_check
      %p937 = pneg %p936
    $region46: #{tpu_custom_call.1} parent=5 // pred_check_branch
      %939 = sbr.rel (%p937) target = $region48
    $region47: #{tpu_custom_call.1} parent=5 // pred_region
      %s940 = ssub.s32 %s11, 2
      // Predicated region
      $region49: #{tpu_custom_call.1} parent=47 // pred_check
        %p941 = pneg %p150
      $region50: #{tpu_custom_call.1} parent=47 // pred_check_branch
        %943 = sbr.rel (%p941) target = $region52
      $region51: #{tpu_custom_call.1} parent=47 // pred_region
        %s944 = smul.u32 32, %s17
        %p945 = scmp.lt.s32.totalorder %s944, 63
        %s946 = scalar_select %p945, %s944, 63
        %s947 = smul.addr %s946, 8
        %s948 = scalar_lea.vmem %s5, %s947
      $region52: #{tpu_custom_call.1} parent=47 // pred_fallthru
        _
    $region48: #{tpu_custom_call.1} parent=5 // pred_fallthru
      _
  $region6: #{tpu_custom_call.1} parent=0 // loop_footer
    %s15 = sadd.s32 1, %s11
  $region7: #{tpu_custom_call.1} parent=0 // loop_footer_branch
    %10 = sbr.rel target = $region3
  $region8: #{tpu_custom_call.1} parent=0 // loop_exit
    _

</llo_original>
